<compile_context>
chip_gen: v6e
topology: v6e:2x2x1
jax: 0.10.0
libtpu: 0.0.40
codegen_flags: <defaults>
</compile_context>

<pallas_src>
import jax
import jax.numpy as jnp
from jax.experimental import pallas as pl
from jax.experimental.pallas import tpu as pltpu


_MAX_ROW_BLOCK = 64   # bounds the per-step store unroll (and compile time)


def _make_right_selector(Ac, mp, dtype):
    """(Ac, Ac*mp) 0/1 lane-expansion selector, identical to `right_mat`."""
    Fc = Ac * mp
    rows = jnp.arange(Ac, dtype=jnp.int32)[:, None]
    cols = jnp.arange(Fc, dtype=jnp.int32)[None, :]
    return (rows == (cols // mp)).astype(dtype)


def _make_left_selector(Ar, mp, dtype):
    """(Ar*mp, Ar) 0/1 row-expansion selector, identical to `left_mat`."""
    Fr = Ar * mp
    rows = jnp.arange(Fr, dtype=jnp.int32)[:, None]
    cols = jnp.arange(Ar, dtype=jnp.int32)[None, :]
    return ((rows // mp) == cols).astype(dtype)


def _expand_kernel(right_ref, a_ref, o_ref):
    nb, arb, ac = a_ref.shape
    fc = o_ref.shape[-1]
    mp = fc // ac

    # Lane (column) expansion: one batch-folded MXU matmul against the
    # resident 0/1 selector (its block index never changes, so it is DMA'd
    # once and stays in VMEM).  HIGHEST precision keeps f32 replication exact.
    a2 = a_ref[...].reshape(nb * arb, ac)
    t = jnp.dot(a2, right_ref[...],
                preferred_element_type=jnp.float32,
                precision=jax.lax.Precision.HIGHEST)
    t = t.reshape(nb, arb, fc).astype(o_ref.dtype)

    # Sublane (row) expansion: mp-way sublane broadcast of each base row,
    # written as contiguous, lane-dense (nb, mp, fc) slabs.  arb is capped in
    # the wrapper, so this unroll is small and every slab is large.
    for i in range(arb):
        o_ref[:, i * mp:(i + 1) * mp, :] = jnp.broadcast_to(
            t[:, i:i + 1, :], (nb, mp, fc))


def _choose_blocks(N, Ar, mp, Fc, itemsize, target_bytes=8 << 20, min_steps=4):
    """Pick (Nb, Arb): batch- and base-row block sizes.

    * output tile (Nb, Arb*mp, Fc) targets ~8 MiB: big enough to amortize the
      ~0.35 us per-step overhead on the store-bound path, small enough that
      double-buffering fits comfortably inside v7x's 64 MiB physical VMEM.
    * no divisor requirement: the grid uses cdiv and Pallas masks the partial
      last block, so awkward/prime N no longer collapses to Nb=1.
    * best effort: >= min_steps total steps and an even count, so v7x's two
      TensorCores get a balanced split of the 'parallel' axes.
    """
    row_slab = max(mp * Fc * itemsize, 1)              # one expanded base row
    arb = max(1, min(Ar, _MAX_ROW_BLOCK, target_bytes // row_slab))
    if arb < Ar and arb % 8 != 0:
        # Keep the (row, lane) dims of the blocks sublane-tile friendly.
        bumped = min(Ar, max(8, (arb // 8) * 8))
        if bumped * row_slab <= 2 * target_bytes:
            arb = bumped
        # else: pathological (one expanded base row >> target).
        # TODO(synk): add an Fc (lane) tiling axis for such shapes.
    slice_bytes = arb * row_slab
    nb = max(1, min(N, target_bytes // slice_bytes))   # batch fills the budget

    gj = -(-Ar // arb)
    gi = -(-N // nb)
    if gi * gj < min_steps and nb > 1:
        want_gi = -(-min_steps // gj)
        nb = max(1, N // want_gi)
        gi = -(-N // nb)
    if (gi * gj) % 2 == 1 and nb > 1:
        nb_even = max(1, N // (gi + 1))
        if ((-(-N // nb_even)) * gj) % 2 == 0:
            nb = nb_even
    return nb, arb


def matrix_expander(A, base_shape, mp):
    """A: (..., Ar, Ac) -> (..., Ar*mp, Ac*mp); matches MatrixExpander.forward.

    Lane-density note: Fc = Ac*mp that is a multiple of 128 keeps every output
    store unmasked (the biggest single lever on this store-bound kernel);
    other widths still work but pay masked partial stores.
    """
    Ar, Ac = base_shape
    Fr, Fc = Ar * mp, Ac * mp
    assert A.shape[-2:] == (Ar, Ac)

    batch_shape = A.shape[:-2]
    N = 1
    for d in batch_shape:
        N *= d
    A_flat = A.reshape((N, Ar, Ac))

    itemsize = jnp.dtype(A.dtype).itemsize
    Nb, Arb = _choose_blocks(N, Ar, mp, Fc, itemsize)
    grid = (pl.cdiv(N, Nb), pl.cdiv(Ar, Arb))

    right_mat = _make_right_selector(Ac, mp, A.dtype)

    out_tile = Nb * Arb * mp * Fc * itemsize
    in_tile = Nb * Arb * Ac * itemsize
    sel_bytes = Ac * Fc * itemsize
    # Double-buffered tiles + resident selector + slack.  >= 32 MiB so tiles
    # larger than v5e's 16 MiB scoped default are allowed; <= 56 MiB so we
    # stay inside v7x's 64 MiB physical VMEM.
    vmem_limit = int(min(56 << 20,
                         max(32 << 20,
                             2 * (out_tile + in_tile + sel_bytes) + (4 << 20))))

    out_flat = pl.pallas_call(
        _expand_kernel,
        out_shape=jax.ShapeDtypeStruct((N, Fr, Fc), A.dtype),
        grid_spec=pltpu.PrefetchScalarGridSpec(
            num_scalar_prefetch=0,
            grid=grid,
            in_specs=[
                # Resident selector: constant block index -> DMA'd once.
                pl.BlockSpec((Ac, Fc), lambda i, j: (0, 0)),
                pl.BlockSpec((Nb, Arb, Ac), lambda i, j: (i, j, 0)),
            ],
            out_specs=pl.BlockSpec((Nb, Arb * mp, Fc), lambda i, j: (i, j, 0)),
        ),
        compiler_params=pltpu.CompilerParams(
            dimension_semantics=("parallel", "parallel"),
            vmem_limit_bytes=vmem_limit),
        cost_estimate=pl.CostEstimate(
            flops=2 * N * Ar * Ac * Fc,
            transcendentals=0,
            bytes_accessed=(N * (Ar * Ac + Fr * Fc) + Ac * Fc) * itemsize),
    )(right_mat, A_flat)

    return out_flat.reshape(batch_shape + (Fr, Fc))


if __name__ == "__main__":
    # Small but lane-dense demo: Fc = Ac*mp = 128 (unmasked full-lane stores),
    # Fr = 128, mp = 8 (whole (8,128)-tile slabs), N = B*C = 8 slices.
    base_shape = (16, 16)   # (Ar, Ac)
    mp = 8                  # block replication factor -> Fr = Fc = 128
    B, C = 2, 4

    key = jax.random.PRNGKey(0)
    A = jax.random.normal(key, (B, C, *base_shape), dtype=jnp.float32)

    out = matrix_expander(A, base_shape, mp)
    out = jax.block_until_ready(out)

    # Reference: the literal torch formulation, left_mat @ (A @ right_mat),
    # at HIGHEST precision (exact 0/1 selection) to mirror the kernel.
    left_mat = _make_left_selector(base_shape[0], mp, jnp.float32)
    right_mat = _make_right_selector(base_shape[1], mp, jnp.float32)
    ref = jnp.einsum("fa,bcax,xg->bcfg", left_mat, A, right_mat,
                     precision=jax.lax.Precision.HIGHEST)

    assert out.shape == (B, C, base_shape[0] * mp, base_shape[1] * mp)
    assert jnp.allclose(out, ref, atol=1e-6, rtol=1e-6)

    print("KERNEL_OK")
</pallas_src>

<mosaic_0001>
module attributes {stable_mosaic.version = 11 : i64} {
  func.func @_expand_kernel(%arg0: i32, %arg1: i32, %arg2: memref<16x128xf32, #tpu.memory_space<vmem>>, %arg3: memref<2x16x16xf32, #tpu.memory_space<vmem>>, %arg4: memref<2x128x128xf32, #tpu.memory_space<vmem>>) attributes {dimension_semantics = [#tpu.dimension_semantics<parallel>, #tpu.dimension_semantics<parallel>], iteration_bounds = array<i64: 4, 1>, scalar_prefetch = 0 : i64, scratch_operands = 0 : i64, tpu.core_type = #tpu.core_type<tc>, window_params = [{pipeline_mode = #tpu.pipeline_mode<synchronous>, transform_indices = @transform_0, window_bounds = array<i64: 16, 128>}, {transform_indices = @transform_1, window_bounds = array<i64: 2, 16, 16>}, {transform_indices = @transform_2, window_bounds = array<i64: 2, 128, 128>}]} {
    %c0 = arith.constant 0 : index
    %c0_0 = arith.constant 0 : index
    %c0_1 = arith.constant 0 : index
    %0 = vector.load %arg3[%c0, %c0_0, %c0_1] : memref<2x16x16xf32, #tpu.memory_space<vmem>>, vector<2x16x16xf32>
    %1 = vector.shape_cast %0 : vector<2x16x16xf32> to vector<32x16xf32>
    %c0_2 = arith.constant 0 : index
    %c0_3 = arith.constant 0 : index
    %2 = vector.load %arg2[%c0_2, %c0_3] : memref<16x128xf32, #tpu.memory_space<vmem>>, vector<16x128xf32>
    %cst = arith.constant dense<0.000000e+00> : vector<32x128xf32>
    %3 = tpu.matmul %1, %2, %cst {dimension_numbers = #tpu.dot_dimension_numbers<[1], [0], [0], [1], [0, 0, 1, 1], [], []>, precision = #tpu.contract_precision<fp32>} : vector<32x16xf32>, vector<16x128xf32>, vector<32x128xf32> -> vector<32x128xf32>
    %4 = vector.shape_cast %3 : vector<32x128xf32> to vector<2x16x128xf32>
    %5 = vector.extract_strided_slice %4 {offsets = [0, 0, 0], sizes = [2, 1, 128], strides = [1, 1, 1]} : vector<2x16x128xf32> to vector<2x1x128xf32>
    %6 = vector.shape_cast %5 : vector<2x1x128xf32> to vector<2x1x128xf32>
    %7 = vector.broadcast %6 : vector<2x1x128xf32> to vector<2x8x128xf32>
    %c0_4 = arith.constant 0 : index
    %c0_5 = arith.constant 0 : index
    %c0_6 = arith.constant 0 : index
    %8 = vector.load %arg4[%c0_4, %c0_5, %c0_6] : memref<2x128x128xf32, #tpu.memory_space<vmem>>, vector<2x8x128xf32>
    tpu.vector_store %arg4[%c0_4, %c0_5, %c0_6], %7 {strides = array<i32>} : memref<2x128x128xf32, #tpu.memory_space<vmem>>, vector<2x8x128xf32>,
    %9 = vector.extract_strided_slice %4 {offsets = [0, 1, 0], sizes = [2, 1, 128], strides = [1, 1, 1]} : vector<2x16x128xf32> to vector<2x1x128xf32>
    %10 = vector.shape_cast %9 : vector<2x1x128xf32> to vector<2x1x128xf32>
    %11 = vector.broadcast %10 : vector<2x1x128xf32> to vector<2x8x128xf32>
    %c0_7 = arith.constant 0 : index
    %c8 = arith.constant 8 : index
    %c0_8 = arith.constant 0 : index
    %12 = vector.load %arg4[%c0_7, %c8, %c0_8] : memref<2x128x128xf32, #tpu.memory_space<vmem>>, vector<2x8x128xf32>
    tpu.vector_store %arg4[%c0_7, %c8, %c0_8], %11 {strides = array<i32>} : memref<2x128x128xf32, #tpu.memory_space<vmem>>, vector<2x8x128xf32>,
    %13 = vector.extract_strided_slice %4 {offsets = [0, 2, 0], sizes = [2, 1, 128], strides = [1, 1, 1]} : vector<2x16x128xf32> to vector<2x1x128xf32>
    %14 = vector.shape_cast %13 : vector<2x1x128xf32> to vector<2x1x128xf32>
    %15 = vector.broadcast %14 : vector<2x1x128xf32> to vector<2x8x128xf32>
    %c0_9 = arith.constant 0 : index
    %c16 = arith.constant 16 : index
    %c0_10 = arith.constant 0 : index
    %16 = vector.load %arg4[%c0_9, %c16, %c0_10] : memref<2x128x128xf32, #tpu.memory_space<vmem>>, vector<2x8x128xf32>
    tpu.vector_store %arg4[%c0_9, %c16, %c0_10], %15 {strides = array<i32>} : memref<2x128x128xf32, #tpu.memory_space<vmem>>, vector<2x8x128xf32>,
    %17 = vector.extract_strided_slice %4 {offsets = [0, 3, 0], sizes = [2, 1, 128], strides = [1, 1, 1]} : vector<2x16x128xf32> to vector<2x1x128xf32>
    %18 = vector.shape_cast %17 : vector<2x1x128xf32> to vector<2x1x128xf32>
    %19 = vector.broadcast %18 : vector<2x1x128xf32> to vector<2x8x128xf32>
    %c0_11 = arith.constant 0 : index
    %c24 = arith.constant 24 : index
    %c0_12 = arith.constant 0 : index
    %20 = vector.load %arg4[%c0_11, %c24, %c0_12] : memref<2x128x128xf32, #tpu.memory_space<vmem>>, vector<2x8x128xf32>
    tpu.vector_store %arg4[%c0_11, %c24, %c0_12], %19 {strides = array<i32>} : memref<2x128x128xf32, #tpu.memory_space<vmem>>, vector<2x8x128xf32>,
    %21 = vector.extract_strided_slice %4 {offsets = [0, 4, 0], sizes = [2, 1, 128], strides = [1, 1, 1]} : vector<2x16x128xf32> to vector<2x1x128xf32>
    %22 = vector.shape_cast %21 : vector<2x1x128xf32> to vector<2x1x128xf32>
    %23 = vector.broadcast %22 : vector<2x1x128xf32> to vector<2x8x128xf32>
    %c0_13 = arith.constant 0 : index
    %c32 = arith.constant 32 : index
    %c0_14 = arith.constant 0 : index
    %24 = vector.load %arg4[%c0_13, %c32, %c0_14] : memref<2x128x128xf32, #tpu.memory_space<vmem>>, vector<2x8x128xf32>
    tpu.vector_store %arg4[%c0_13, %c32, %c0_14], %23 {strides = array<i32>} : memref<2x128x128xf32, #tpu.memory_space<vmem>>, vector<2x8x128xf32>,
    %25 = vector.extract_strided_slice %4 {offsets = [0, 5, 0], sizes = [2, 1, 128], strides = [1, 1, 1]} : vector<2x16x128xf32> to vector<2x1x128xf32>
    %26 = vector.shape_cast %25 : vector<2x1x128xf32> to vector<2x1x128xf32>
    %27 = vector.broadcast %26 : vector<2x1x128xf32> to vector<2x8x128xf32>
    %c0_15 = arith.constant 0 : index
    %c40 = arith.constant 40 : index
    %c0_16 = arith.constant 0 : index
    %28 = vector.load %arg4[%c0_15, %c40, %c0_16] : memref<2x128x128xf32, #tpu.memory_space<vmem>>, vector<2x8x128xf32>
    tpu.vector_store %arg4[%c0_15, %c40, %c0_16], %27 {strides = array<i32>} : memref<2x128x128xf32, #tpu.memory_space<vmem>>, vector<2x8x128xf32>,
    %29 = vector.extract_strided_slice %4 {offsets = [0, 6, 0], sizes = [2, 1, 128], strides = [1, 1, 1]} : vector<2x16x128xf32> to vector<2x1x128xf32>
    %30 = vector.shape_cast %29 : vector<2x1x128xf32> to vector<2x1x128xf32>
    %31 = vector.broadcast %30 : vector<2x1x128xf32> to vector<2x8x128xf32>
    %c0_17 = arith.constant 0 : index
    %c48 = arith.constant 48 : index
    %c0_18 = arith.constant 0 : index
    %32 = vector.load %arg4[%c0_17, %c48, %c0_18] : memref<2x128x128xf32, #tpu.memory_space<vmem>>, vector<2x8x128xf32>
    tpu.vector_store %arg4[%c0_17, %c48, %c0_18], %31 {strides = array<i32>} : memref<2x128x128xf32, #tpu.memory_space<vmem>>, vector<2x8x128xf32>,
    %33 = vector.extract_strided_slice %4 {offsets = [0, 7, 0], sizes = [2, 1, 128], strides = [1, 1, 1]} : vector<2x16x128xf32> to vector<2x1x128xf32>
    %34 = vector.shape_cast %33 : vector<2x1x128xf32> to vector<2x1x128xf32>
    %35 = vector.broadcast %34 : vector<2x1x128xf32> to vector<2x8x128xf32>
    %c0_19 = arith.constant 0 : index
    %c56 = arith.constant 56 : index
    %c0_20 = arith.constant 0 : index
    %36 = vector.load %arg4[%c0_19, %c56, %c0_20] : memref<2x128x128xf32, #tpu.memory_space<vmem>>, vector<2x8x128xf32>
    tpu.vector_store %arg4[%c0_19, %c56, %c0_20], %35 {strides = array<i32>} : memref<2x128x128xf32, #tpu.memory_space<vmem>>, vector<2x8x128xf32>,
    %37 = vector.extract_strided_slice %4 {offsets = [0, 8, 0], sizes = [2, 1, 128], strides = [1, 1, 1]} : vector<2x16x128xf32> to vector<2x1x128xf32>
    %38 = vector.shape_cast %37 : vector<2x1x128xf32> to vector<2x1x128xf32>
    %39 = vector.broadcast %38 : vector<2x1x128xf32> to vector<2x8x128xf32>
    %c0_21 = arith.constant 0 : index
    %c64 = arith.constant 64 : index
    %c0_22 = arith.constant 0 : index
    %40 = vector.load %arg4[%c0_21, %c64, %c0_22] : memref<2x128x128xf32, #tpu.memory_space<vmem>>, vector<2x8x128xf32>
    tpu.vector_store %arg4[%c0_21, %c64, %c0_22], %39 {strides = array<i32>} : memref<2x128x128xf32, #tpu.memory_space<vmem>>, vector<2x8x128xf32>,
    %41 = vector.extract_strided_slice %4 {offsets = [0, 9, 0], sizes = [2, 1, 128], strides = [1, 1, 1]} : vector<2x16x128xf32> to vector<2x1x128xf32>
    %42 = vector.shape_cast %41 : vector<2x1x128xf32> to vector<2x1x128xf32>
    %43 = vector.broadcast %42 : vector<2x1x128xf32> to vector<2x8x128xf32>
    %c0_23 = arith.constant 0 : index
    %c72 = arith.constant 72 : index
    %c0_24 = arith.constant 0 : index
    %44 = vector.load %arg4[%c0_23, %c72, %c0_24] : memref<2x128x128xf32, #tpu.memory_space<vmem>>, vector<2x8x128xf32>
    tpu.vector_store %arg4[%c0_23, %c72, %c0_24], %43 {strides = array<i32>} : memref<2x128x128xf32, #tpu.memory_space<vmem>>, vector<2x8x128xf32>,
    %45 = vector.extract_strided_slice %4 {offsets = [0, 10, 0], sizes = [2, 1, 128], strides = [1, 1, 1]} : vector<2x16x128xf32> to vector<2x1x128xf32>
    %46 = vector.shape_cast %45 : vector<2x1x128xf32> to vector<2x1x128xf32>
    %47 = vector.broadcast %46 : vector<2x1x128xf32> to vector<2x8x128xf32>
    %c0_25 = arith.constant 0 : index
    %c80 = arith.constant 80 : index
    %c0_26 = arith.constant 0 : index
    %48 = vector.load %arg4[%c0_25, %c80, %c0_26] : memref<2x128x128xf32, #tpu.memory_space<vmem>>, vector<2x8x128xf32>
    tpu.vector_store %arg4[%c0_25, %c80, %c0_26], %47 {strides = array<i32>} : memref<2x128x128xf32, #tpu.memory_space<vmem>>, vector<2x8x128xf32>,
    %49 = vector.extract_strided_slice %4 {offsets = [0, 11, 0], sizes = [2, 1, 128], strides = [1, 1, 1]} : vector<2x16x128xf32> to vector<2x1x128xf32>
    %50 = vector.shape_cast %49 : vector<2x1x128xf32> to vector<2x1x128xf32>
    %51 = vector.broadcast %50 : vector<2x1x128xf32> to vector<2x8x128xf32>
    %c0_27 = arith.constant 0 : index
    %c88 = arith.constant 88 : index
    %c0_28 = arith.constant 0 : index
    %52 = vector.load %arg4[%c0_27, %c88, %c0_28] : memref<2x128x128xf32, #tpu.memory_space<vmem>>, vector<2x8x128xf32>
    tpu.vector_store %arg4[%c0_27, %c88, %c0_28], %51 {strides = array<i32>} : memref<2x128x128xf32, #tpu.memory_space<vmem>>, vector<2x8x128xf32>,
    %53 = vector.extract_strided_slice %4 {offsets = [0, 12, 0], sizes = [2, 1, 128], strides = [1, 1, 1]} : vector<2x16x128xf32> to vector<2x1x128xf32>
    %54 = vector.shape_cast %53 : vector<2x1x128xf32> to vector<2x1x128xf32>
    %55 = vector.broadcast %54 : vector<2x1x128xf32> to vector<2x8x128xf32>
    %c0_29 = arith.constant 0 : index
    %c96 = arith.constant 96 : index
    %c0_30 = arith.constant 0 : index
    %56 = vector.load %arg4[%c0_29, %c96, %c0_30] : memref<2x128x128xf32, #tpu.memory_space<vmem>>, vector<2x8x128xf32>
    tpu.vector_store %arg4[%c0_29, %c96, %c0_30], %55 {strides = array<i32>} : memref<2x128x128xf32, #tpu.memory_space<vmem>>, vector<2x8x128xf32>,
    %57 = vector.extract_strided_slice %4 {offsets = [0, 13, 0], sizes = [2, 1, 128], strides = [1, 1, 1]} : vector<2x16x128xf32> to vector<2x1x128xf32>
    %58 = vector.shape_cast %57 : vector<2x1x128xf32> to vector<2x1x128xf32>
    %59 = vector.broadcast %58 : vector<2x1x128xf32> to vector<2x8x128xf32>
    %c0_31 = arith.constant 0 : index
    %c104 = arith.constant 104 : index
    %c0_32 = arith.constant 0 : index
    %60 = vector.load %arg4[%c0_31, %c104, %c0_32] : memref<2x128x128xf32, #tpu.memory_space<vmem>>, vector<2x8x128xf32>
    tpu.vector_store %arg4[%c0_31, %c104, %c0_32], %59 {strides = array<i32>} : memref<2x128x128xf32, #tpu.memory_space<vmem>>, vector<2x8x128xf32>,
    %61 = vector.extract_strided_slice %4 {offsets = [0, 14, 0], sizes = [2, 1, 128], strides = [1, 1, 1]} : vector<2x16x128xf32> to vector<2x1x128xf32>
    %62 = vector.shape_cast %61 : vector<2x1x128xf32> to vector<2x1x128xf32>
    %63 = vector.broadcast %62 : vector<2x1x128xf32> to vector<2x8x128xf32>
    %c0_33 = arith.constant 0 : index
    %c112 = arith.constant 112 : index
    %c0_34 = arith.constant 0 : index
    %64 = vector.load %arg4[%c0_33, %c112, %c0_34] : memref<2x128x128xf32, #tpu.memory_space<vmem>>, vector<2x8x128xf32>
    tpu.vector_store %arg4[%c0_33, %c112, %c0_34], %63 {strides = array<i32>} : memref<2x128x128xf32, #tpu.memory_space<vmem>>, vector<2x8x128xf32>,
    %65 = vector.extract_strided_slice %4 {offsets = [0, 15, 0], sizes = [2, 1, 128], strides = [1, 1, 1]} : vector<2x16x128xf32> to vector<2x1x128xf32>
    %66 = vector.shape_cast %65 : vector<2x1x128xf32> to vector<2x1x128xf32>
    %67 = vector.broadcast %66 : vector<2x1x128xf32> to vector<2x8x128xf32>
    %c0_35 = arith.constant 0 : index
    %c120 = arith.constant 120 : index
    %c0_36 = arith.constant 0 : index
    %68 = vector.load %arg4[%c0_35, %c120, %c0_36] : memref<2x128x128xf32, #tpu.memory_space<vmem>>, vector<2x8x128xf32>
    tpu.vector_store %arg4[%c0_35, %c120, %c0_36], %67 {strides = array<i32>} : memref<2x128x128xf32, #tpu.memory_space<vmem>>, vector<2x8x128xf32>,
    return
  }
  func.func @transform_0(%arg0: i32, %arg1: i32) -> (i32, i32) {
    %c0_i32 = arith.constant 0 : i32
    %c0_i32_0 = arith.constant 0 : i32
    %c0_i32_1 = arith.constant 0 : i32
    return %c0_i32, %c0_i32_0 : i32, i32
  }
  func.func @transform_1(%arg0: i32, %arg1: i32) -> (i32, i32, i32) {
    %c0_i32 = arith.constant 0 : i32
    %c0_i32_0 = arith.constant 0 : i32
    return %arg0, %arg1, %c0_i32 : i32, i32, i32
  }
  func.func @transform_2(%arg0: i32, %arg1: i32) -> (i32, i32, i32) {
    %c0_i32 = arith.constant 0 : i32
    %c0_i32_0 = arith.constant 0 : i32
    return %arg0, %arg1, %c0_i32 : i32, i32, i32
  }
}

</mosaic_0001>

<llo_original>
// kernel: tpu_custom_call.1
$region0: #{tpu_custom_call.1}
  #allocation0 [shape = 'u32[]', space=smem, size = 0x4, offset = 0x4, fixed_abs, tag = 'smem constant byte address 0x4 - core index']
  #allocation1 [shape = 'u32[144,128]{1,0:T(1,128)}', space=vmem, size = 0x12000, scoped, tag = 'internal scratch']
  %s0 = inlined_call_operand.hbm [shape: f32[16,128], index: 0, kind: input, shape index: {}]
  %s1 = inlined_call_operand.hbm [shape: f32[8,16,16], index: 1, kind: input, shape index: {}]
  %s2 = inlined_call_operand.hbm [shape: f32[8,128,128], index: 2, kind: output, shape index: {}]
  %s3 = sld [smem:[#allocation0]]
  $region49: #{tpu_custom_call.1} parent=0
    _
  %s5 = ssub.s32 1, %s3
  %s6 = scalar_select 0, %s5, %s3
  $region1: #{tpu_custom_call.1} parent=0
    #allocation2 [shape = 'u8[8192]{0}', space=vmem, size = 0x2000, scoped, tag = 'input window, operand 0, single buffered']
    #allocation3 [shape = 's32[2]{0}', space=sflag, size = 0x8, scoped, tag = 'scoped memory for tpu_custom_call.1']
    #allocation4 [shape = 's32[2]{0}', space=sflag, size = 0x8, scoped, tag = 'scoped memory for tpu_custom_call.1']
    #allocation5 [shape = 'u8[32768]{0}', space=vmem, size = 0x8000, scoped, tag = 'input window, operand 1']
    #allocation6 [shape = 's32[2]{0}', space=sflag, size = 0x8, scoped, tag = 'scoped memory for tpu_custom_call.1']
    #allocation7 [shape = 'u8[262144]{0}', space=vmem, size = 0x40000, scoped, tag = 'output window, operand 0']
    %7 = vsyncpa [#allocation3], 0
    %8 = vsyncpa [#allocation6], 0
    %s9 = scalar_lea.sflag [#allocation6], 1
    %10 = vsyncpa %s9, 0
    %11 = vsyncpa [#allocation4], 0
    %s12 = scalar_lea.sflag [#allocation4], 1
    %13 = vsyncpa %s12, 0
    loop: start=0, step=1, limit=6
    $region2: #{tpu_custom_call.1} parent=1 // loop_pre_header
      _
    $region3: #{tpu_custom_call.1} parent=1 // loop_header
      %s15 = sphi 0, %s19
      %p16 = scmp.ge.s32.totalorder %s15, 6
      %s22 = sphi 0, %s34
      %s23 = sphi 0, %s30
      %s24 = sphi 0, %s22
      %s25 = sphi 0, %s23
      %s26 = sphi 0, %s24
      %s27 = sphi 0, %s25
      %s35 = sphi 0, %s35
      %s37 = sphi 0, %s35
      %s38 = sphi 0, %s37
      %s52 = sphi 0, %s38
      %s60 = sphi 0, %s62
      %s63 = sphi 0, %s60
      %s64 = sphi 0, %s63
      %s80 = sphi 0, %s64
      %s88 = sphi 0, %s90
      %s91 = sphi 0, %s88
      %s92 = sphi 0, %s91
      %s108 = sphi 0, %s92
    $region4: #{tpu_custom_call.1} parent=1 // loop_header_branch
      %18 = sbr.rel (%p16) target = $region8
    $region5: #{tpu_custom_call.1} parent=1 // loop_body
      %s20 = ssub.s32 %s15, 1
      %s21 = ssub.s32 %s15, 2
      %s28 = sadd.s32 1, %s23
      %p29 = scmp.ge.s32.totalorder %s28, 1
      %s30 = scalar_select %p29, 0, %s28
      %s31 = sadd.s32 1, %s22
      %s32 = scalar_select %p29, %s31, %s22
      %p33 = scmp.ge.s32.totalorder %s32, 4
      %s34 = scalar_select %p33, 0, %s32
      %s36 = sadd.s32 %s35, 1
      %p39 = scmp.eq.s32.totalorder %s15, 3
      %p40 = scmp.ne.s32.totalorder %s35, %s37
      %p41 = scmp.eq.s32.totalorder %s15, 0
      %p42 = por %p40, %p41
      %p43 = scmp.ne.s32.totalorder %s35, %s37
      %p44 = scmp.eq.s32.totalorder %s20, 3
      %p45 = por %p43, %p44
      %p46 = scmp.ne.s32.totalorder %s37, %s38
      %p47 = scmp.eq.s32.totalorder %s20, 0
      %p48 = por %p46, %p47
      %p49 = scmp.ne.s32.totalorder %s37, %s38
      %p50 = scmp.eq.s32.totalorder %s21, 3
      %p51 = por %p49, %p50
      %p53 = scmp.ne.s32.totalorder %s38, %s52
      %p54 = scmp.eq.s32.totalorder %s21, 0
      %p55 = por %p53, %p54
      %s56 = ssub.s32 %s22, %s34
      %s57 = ssub.s32 %s23, %s30
      %s58 = sor.u32 %s56, %s57
      %p59 = scmp.eq.s32.totalorder %s58, 0
      %s61 = sadd.s32 %s60, 1
      %s62 = scalar_select %p59, %s60, %s61
      %p65 = pneg %p59
      %p66 = scmp.eq.s32.totalorder %s15, 3
      %p67 = por %p65, %p66
      %p68 = scmp.ne.s32.totalorder %s60, %s63
      %p69 = scmp.eq.s32.totalorder %s15, 0
      %p70 = por %p68, %p69
      %p71 = scmp.ne.s32.totalorder %s60, %s63
      %p72 = scmp.eq.s32.totalorder %s20, 3
      %p73 = por %p71, %p72
      %p74 = scmp.ne.s32.totalorder %s63, %s64
      %p75 = scmp.eq.s32.totalorder %s20, 0
      %p76 = por %p74, %p75
      %p77 = scmp.ne.s32.totalorder %s63, %s64
      %p78 = scmp.eq.s32.totalorder %s21, 3
      %p79 = por %p77, %p78
      %p81 = scmp.ne.s32.totalorder %s64, %s80
      %p82 = scmp.eq.s32.totalorder %s21, 0
      %p83 = por %p81, %p82
      %s84 = ssub.s32 %s22, %s34
      %s85 = ssub.s32 %s23, %s30
      %s86 = sor.u32 %s84, %s85
      %p87 = scmp.eq.s32.totalorder %s86, 0
      %s89 = sadd.s32 %s88, 1
      %s90 = scalar_select %p87, %s88, %s89
      %p93 = pneg %p87
      %p94 = scmp.eq.s32.totalorder %s15, 3
      %p95 = por %p93, %p94
      %p96 = scmp.ne.s32.totalorder %s88, %s91
      %p97 = scmp.eq.s32.totalorder %s15, 0
      %p98 = por %p96, %p97
      %p99 = scmp.ne.s32.totalorder %s88, %s91
      %p100 = scmp.eq.s32.totalorder %s20, 3
      %p101 = por %p99, %p100
      %p102 = scmp.ne.s32.totalorder %s91, %s92
      %p103 = scmp.eq.s32.totalorder %s20, 0
      %p104 = por %p102, %p103
      %p105 = scmp.ne.s32.totalorder %s91, %s92
      %p106 = scmp.eq.s32.totalorder %s21, 3
      %p107 = por %p105, %p106
      %p109 = scmp.ne.s32.totalorder %s92, %s108
      %p110 = scmp.eq.s32.totalorder %s21, 0
      %p111 = por %p109, %p110
      %p112 = scmp.le.s32.totalorder 1, %s15
      %p113 = scmp.lt.s32.totalorder %s15, 5
      %p114 = pnand %p112, %p113
      %p115 = pneg %p114
      // Predicated region
      $region9: #{tpu_custom_call.1} parent=5 // pred_check
        _
      $region10: #{tpu_custom_call.1} parent=5 // pred_check_branch
        %117 = sbr.rel (%p114) target = $region12
      $region11: #{tpu_custom_call.1} parent=5 // pred_region
        %s118 = ssub.s32 %s15, 1
        // Predicated region
        $region13: #{tpu_custom_call.1} parent=11 // pred_check
          %p119 = pneg %p48
        $region14: #{tpu_custom_call.1} parent=11 // pred_check_branch
          %121 = sbr.rel (%p119) target = $region16
        $region15: #{tpu_custom_call.1} parent=11 // pred_region
          %s123 = ssub.s32 256, 256
          %124 = vsyncadd [#allocation3], %s123
          %s125 = sshll.u32 [#allocation2], 4
          %s126 = int_to_ptr.vmem [resolvable:$true] %s125
          %131 = dma.hbm_to_vmem [thread:$0]  %s0, 256, %s126, [#allocation3], 128, 128, 8
        $region16: #{tpu_custom_call.1} parent=11 // pred_fallthru
          _
      $region12: #{tpu_custom_call.1} parent=5 // pred_fallthru
        _
      %p132 = scmp.lt.s32.totalorder %s15, 4
      // Predicated region
      $region17: #{tpu_custom_call.1} parent=5 // pred_check
        %p133 = pneg %p132
      $region18: #{tpu_custom_call.1} parent=5 // pred_check_branch
        %135 = sbr.rel (%p133) target = $region20
      $region19: #{tpu_custom_call.1} parent=5 // pred_region
        // Predicated region
        $region21: #{tpu_custom_call.1} parent=19 // pred_check
          %p136 = pneg %p70
        $region22: #{tpu_custom_call.1} parent=19 // pred_check_branch
          %138 = sbr.rel (%p136) target = $region24
        $region23: #{tpu_custom_call.1} parent=19 // pred_region
          %s139 = sand.u32 %s60, 1
          %s140 = scalar_lea.sflag [#allocation6], %s139
          %s141 = sand.u32 %s60, 1
          %s142 = smul.addr %s141, 32
          %s143 = scalar_lea.vmem [#allocation5], %s142
          %s144 = smul.u32 2, %s22
          %s145 = smul.u32 2, %s23
          %s147 = ssub.s32 512, 512
          %148 = vsyncadd %s140, %s147
          %s149 = smul.addr %s144, 2
          %s150 = sadd.s32 %s145, %s149
          %s151 = smul.addr %s150, 128
          %s152 = scalar_lea.hbm %s1, %s151
          %s153 = sshll.u32 %s143, 4
          %s154 = int_to_ptr.vmem [resolvable:$true] %s153
          %159 = dma.hbm_to_vmem [thread:$0]  %s152, 512, %s154, %s140, 128, 128, 8
        $region24: #{tpu_custom_call.1} parent=19 // pred_fallthru
          _
      $region20: #{tpu_custom_call.1} parent=5 // pred_fallthru
        _
      %p160 = scmp.le.s32.totalorder 1, %s15
      %p161 = scmp.lt.s32.totalorder %s15, 5
      %p162 = pnand %p160, %p161
      %p163 = pneg %p162
      // Predicated region
      $region25: #{tpu_custom_call.1} parent=5 // pred_check
        _
      $region26: #{tpu_custom_call.1} parent=5 // pred_check_branch
        %165 = sbr.rel (%p162) target = $region28
      $region27: #{tpu_custom_call.1} parent=5 // pred_region
        %s166 = ssub.s32 %s15, 1
        // Predicated region
        $region29: #{tpu_custom_call.1} parent=27 // pred_check
          %p167 = pneg %p48
        $region30: #{tpu_custom_call.1} parent=27 // pred_check_branch
          %169 = sbr.rel (%p167) target = $region32
        $region31: #{tpu_custom_call.1} parent=27 // pred_region
          %170 = dma.done [#allocation3], 256
        $region32: #{tpu_custom_call.1} parent=27 // pred_fallthru
          _
        %s171 = sand.u32 %s63, 1
        %s172 = scalar_lea.sflag [#allocation6], %s171
        %s173 = sand.u32 %s63, 1
        %s174 = smul.addr %s173, 32
        %s175 = scalar_lea.vmem [#allocation5], %s174
        // Predicated region
        $region33: #{tpu_custom_call.1} parent=27 // pred_check
          %p176 = pneg %p76
        $region34: #{tpu_custom_call.1} parent=27 // pred_check_branch
          %178 = sbr.rel (%p176) target = $region36
        $region35: #{tpu_custom_call.1} parent=27 // pred_region
          %179 = dma.done %s172, 512
        $region36: #{tpu_custom_call.1} parent=27 // pred_fallthru
          _
        %p180 = pneg %p48
        %p181 = pneg %p45
        %s182 = sand.u32 %s63, 1
        %s183 = scalar_lea.sflag [#allocation6], %s182
        %s184 = sand.u32 %s63, 1
        %s185 = smul.addr %s184, 32
        %s186 = scalar_lea.vmem [#allocation5], %s185
        %p187 = pneg %p76
        %p188 = pneg %p73
        %p189 = pneg %p104
        %p190 = pneg %p101
        %s191 = sand.u32 %s91, 1
        %s192 = scalar_lea.sflag [#allocation4], %s191
        %s193 = sand.u32 %s91, 1
        %s194 = smul.addr %s193, 256
        %s195 = scalar_lea.vmem [#allocation7], %s194
        %s196 = smul.u32 2, %s24
        %s197 = smul.u32 2, %s25
        %s198 = smul.u32 2, %s24
        %s199 = smul.u32 16, %s25
        %v200 = vld [vmem:[%s175] sm:$0xff]
        %v201 = vld [vmem:[%s175 + $0x8] sm:$0xff]
        %v202 = vld [vmem:[%s175 + $0x10] sm:$0xff]
        %v203 = vld [vmem:[%s175 + $0x18] sm:$0xff]
        %v204 = vld [vmem:[#allocation2] sm:$0xff]
        %v205 = vld [vmem:[#allocation2 + $0x8] sm:$0xff]
        %vm206 = vcmask 130048
        %v208 = vsel %vm206, %v200, 0
        %v211 = vsel %vm206, %v201, 0
        %v214 = vsel %vm206, %v202, 0
        %v217 = vsel %vm206, %v203, 0
        %219 = vmatprep.subr.mxu0 0.0
        %220 = vmatpush1.msra.mxu0 0.0
        %221 = vmatprep.subr.mxu0 0.0
        %222 = vmatpush1.msra.mxu0 0.0
        %223 = vmatprep.subr.mxu0 0.0
        %224 = vmatpush1.msra.mxu0 0.0
        %225 = vmatprep.subr.mxu0 0.0
        %226 = vmatpush1.msra.mxu0 0.0
        %227 = vmatprep.subr.mxu0 0.0
        %228 = vmatpush1.msra.mxu0 0.0
        %229 = vmatprep.subr.mxu0 0.0
        %230 = vmatpush1.msra.mxu0 0.0
        %231 = vmatprep.subr.mxu0 0.0
        %232 = vmatpush1.msra.mxu0 0.0
        %233 = vmatprep.subr.mxu0 0.0
        %234 = vmatpush1.msra.mxu0 0.0
        %235 = vmatprep.subr.mxu0 0.0
        %236 = vmatpush1.msra.mxu0 0.0
        %237 = vmatprep.subr.mxu0 0.0
        %238 = vmatpush1.msra.mxu0 0.0
        %239 = vmatprep.subr.mxu0 0.0
        %240 = vmatpush1.msra.mxu0 0.0
        %241 = vmatprep.subr.mxu0 0.0
        %242 = vmatpush1.msra.mxu0 0.0
        %243 = vmatprep.subr.mxu0 0.0
        %244 = vmatpush1.msra.mxu0 0.0
        %245 = vmatprep.subr.mxu0 0.0
        %246 = vmatpush1.msra.mxu0 0.0
        %247 = vmatprep.subr.mxu0 0.0
        %v248 = vand.u32 %v205, 4294901760
        %249 = vmatpush1.msra.mxu0 %v248
        %250 = vmatprep.subr.mxu0 0.0
        %v251 = vand.u32 %v204, 4294901760
        %252 = vmatpush1.msra.mxu0 %v251
        %253 = vmatprep.subr.mxu0 0.0
        %254 = vmatpush2.msra.mxu0 0.0
        %255 = vmatprep.subr.mxu0 0.0
        %256 = vmatpush2.msra.mxu0 0.0
        %257 = vmatprep.subr.mxu0 0.0
        %258 = vmatpush2.msra.mxu0 0.0
        %259 = vmatprep.subr.mxu0 0.0
        %260 = vmatpush2.msra.mxu0 0.0
        %261 = vmatprep.subr.mxu0 0.0
        %262 = vmatpush2.msra.mxu0 0.0
        %263 = vmatprep.subr.mxu0 0.0
        %264 = vmatpush2.msra.mxu0 0.0
        %265 = vmatprep.subr.mxu0 0.0
        %266 = vmatpush2.msra.mxu0 0.0
        %267 = vmatprep.subr.mxu0 0.0
        %268 = vmatpush2.msra.mxu0 0.0
        %269 = vmatprep.subr.mxu0 0.0
        %270 = vmatpush2.msra.mxu0 0.0
        %271 = vmatprep.subr.mxu0 0.0
        %272 = vmatpush2.msra.mxu0 0.0
        %273 = vmatprep.subr.mxu0 0.0
        %274 = vmatpush2.msra.mxu0 0.0
        %275 = vmatprep.subr.mxu0 0.0
        %276 = vmatpush2.msra.mxu0 0.0
        %277 = vmatprep.subr.mxu0 0.0
        %278 = vmatpush2.msra.mxu0 0.0
        %279 = vmatprep.subr.mxu0 0.0
        %280 = vmatpush2.msra.mxu0 0.0
        %281 = vmatprep.subr.mxu0 0.0
        %282 = vmatpush2.msra.mxu0 0.0
        %283 = vmatprep.subr.mxu0 0.0
        %284 = vmatpush2.msra.mxu0 0.0
        %285 = vmatprep.mubr.f32.mxu0 0.0
        %v286 = vand.u32 %v208, 4294901760
        %v287 = vsub.f32 %v208, %v286
        %v288 = vand.u32 %v287, 4294901760
        %v289 = vsub.f32 %v287, %v288
        %v290 = vand.u32 %v289, 4294901760
        %291 = vmatmul.mubr.f32.gmra.mxu0 %v290
        %v292 = vpop.f32.mrf.mxu0
        %v293 = vadd.f32 0.0, %v292
        %v294 = vpop.f32.mrf.mxu0
        %295 = vmatprep.mubr.f32.mxu0 0.0
        %v296 = vand.u32 %v211, 4294901760
        %v297 = vsub.f32 %v211, %v296
        %v298 = vand.u32 %v297, 4294901760
        %v299 = vsub.f32 %v297, %v298
        %v300 = vand.u32 %v299, 4294901760
        %301 = vmatmul.mubr.f32.gmra.mxu0 %v300
        %v302 = vpop.f32.mrf.mxu0
        %v303 = vadd.f32 0.0, %v302
        %v304 = vpop.f32.mrf.mxu0
        %305 = vmatprep.mubr.f32.mxu0 0.0
        %v306 = vand.u32 %v214, 4294901760
        %v307 = vsub.f32 %v214, %v306
        %v308 = vand.u32 %v307, 4294901760
        %v309 = vsub.f32 %v307, %v308
        %v310 = vand.u32 %v309, 4294901760
        %311 = vmatmul.mubr.f32.gmra.mxu0 %v310
        %v312 = vpop.f32.mrf.mxu0
        %v313 = vadd.f32 0.0, %v312
        %v314 = vpop.f32.mrf.mxu0
        %315 = vmatprep.mubr.f32.mxu0 0.0
        %v316 = vand.u32 %v217, 4294901760
        %v317 = vsub.f32 %v217, %v316
        %v318 = vand.u32 %v317, 4294901760
        %v319 = vsub.f32 %v317, %v318
        %v320 = vand.u32 %v319, 4294901760
        %321 = vmatmul.mubr.f32.gmra.mxu0 %v320
        %v322 = vpop.f32.mrf.mxu0
        %v323 = vadd.f32 0.0, %v322
        %v324 = vpop.f32.mrf.mxu0
        %325 = vdwg.mxu0
        %326 = vmatprep.subr.mxu0 0.0
        %327 = vmatpush1.msra.mxu0 0.0
        %328 = vmatprep.subr.mxu0 0.0
        %329 = vmatpush1.msra.mxu0 0.0
        %330 = vmatprep.subr.mxu0 0.0
        %331 = vmatpush1.msra.mxu0 0.0
        %332 = vmatprep.subr.mxu0 0.0
        %333 = vmatpush1.msra.mxu0 0.0
        %334 = vmatprep.subr.mxu0 0.0
        %335 = vmatpush1.msra.mxu0 0.0
        %336 = vmatprep.subr.mxu0 0.0
        %337 = vmatpush1.msra.mxu0 0.0
        %338 = vmatprep.subr.mxu0 0.0
        %339 = vmatpush1.msra.mxu0 0.0
        %340 = vmatprep.subr.mxu0 0.0
        %341 = vmatpush1.msra.mxu0 0.0
        %342 = vmatprep.subr.mxu0 0.0
        %343 = vmatpush1.msra.mxu0 0.0
        %344 = vmatprep.subr.mxu0 0.0
        %345 = vmatpush1.msra.mxu0 0.0
        %346 = vmatprep.subr.mxu0 0.0
        %347 = vmatpush1.msra.mxu0 0.0
        %348 = vmatprep.subr.mxu0 0.0
        %349 = vmatpush1.msra.mxu0 0.0
        %350 = vmatprep.subr.mxu0 0.0
        %351 = vmatpush1.msra.mxu0 0.0
        %352 = vmatprep.subr.mxu0 0.0
        %353 = vmatpush1.msra.mxu0 0.0
        %354 = vmatprep.subr.mxu0 0.0
        %v355 = vand.u32 %v205, 4294901760
        %v356 = vsub.f32 %v205, %v355
        %v357 = vand.u32 %v356, 4294901760
        %v358 = vsub.f32 %v356, %v357
        %v359 = vand.u32 %v358, 4294901760
        %360 = vmatpush1.msra.mxu0 %v359
        %361 = vmatprep.subr.mxu0 0.0
        %v362 = vand.u32 %v204, 4294901760
        %v363 = vsub.f32 %v204, %v362
        %v364 = vand.u32 %v363, 4294901760
        %v365 = vsub.f32 %v363, %v364
        %v366 = vand.u32 %v365, 4294901760
        %367 = vmatpush1.msra.mxu0 %v366
        %368 = vmatprep.subr.mxu0 0.0
        %369 = vmatpush2.msra.mxu0 0.0
        %370 = vmatprep.subr.mxu0 0.0
        %371 = vmatpush2.msra.mxu0 0.0
        %372 = vmatprep.subr.mxu0 0.0
        %373 = vmatpush2.msra.mxu0 0.0
        %374 = vmatprep.subr.mxu0 0.0
        %375 = vmatpush2.msra.mxu0 0.0
        %376 = vmatprep.subr.mxu0 0.0
        %377 = vmatpush2.msra.mxu0 0.0
        %378 = vmatprep.subr.mxu0 0.0
        %379 = vmatpush2.msra.mxu0 0.0
        %380 = vmatprep.subr.mxu0 0.0
        %381 = vmatpush2.msra.mxu0 0.0
        %382 = vmatprep.subr.mxu0 0.0
        %383 = vmatpush2.msra.mxu0 0.0
        %384 = vmatprep.subr.mxu0 0.0
        %385 = vmatpush2.msra.mxu0 0.0
        %386 = vmatprep.subr.mxu0 0.0
        %387 = vmatpush2.msra.mxu0 0.0
        %388 = vmatprep.subr.mxu0 0.0
        %389 = vmatpush2.msra.mxu0 0.0
        %390 = vmatprep.subr.mxu0 0.0
        %391 = vmatpush2.msra.mxu0 0.0
        %392 = vmatprep.subr.mxu0 0.0
        %393 = vmatpush2.msra.mxu0 0.0
        %394 = vmatprep.subr.mxu0 0.0
        %395 = vmatpush2.msra.mxu0 0.0
        %396 = vmatprep.subr.mxu0 0.0
        %397 = vmatpush2.msra.mxu0 0.0
        %398 = vmatprep.subr.mxu0 0.0
        %399 = vmatpush2.msra.mxu0 0.0
        %400 = vmatprep.mubr.f32.mxu0 0.0
        %v401 = vand.u32 %v208, 4294901760
        %402 = vmatmul.mubr.f32.gmra.mxu0 %v401
        %v403 = vpop.f32.mrf.mxu0
        %v404 = vadd.f32 %v293, %v403
        %v405 = vpop.f32.mrf.mxu0
        %406 = vmatprep.mubr.f32.mxu0 0.0
        %v407 = vand.u32 %v211, 4294901760
        %408 = vmatmul.mubr.f32.gmra.mxu0 %v407
        %v409 = vpop.f32.mrf.mxu0
        %v410 = vadd.f32 %v303, %v409
        %v411 = vpop.f32.mrf.mxu0
        %412 = vmatprep.mubr.f32.mxu0 0.0
        %v413 = vand.u32 %v214, 4294901760
        %414 = vmatmul.mubr.f32.gmra.mxu0 %v413
        %v415 = vpop.f32.mrf.mxu0
        %v416 = vadd.f32 %v313, %v415
        %v417 = vpop.f32.mrf.mxu0
        %418 = vmatprep.mubr.f32.mxu0 0.0
        %v419 = vand.u32 %v217, 4294901760
        %420 = vmatmul.mubr.f32.gmra.mxu0 %v419
        %v421 = vpop.f32.mrf.mxu0
        %v422 = vadd.f32 %v323, %v421
        %v423 = vpop.f32.mrf.mxu0
        %424 = vdwg.mxu0
        %425 = vmatprep.subr.mxu0 0.0
        %426 = vmatpush1.msra.mxu0 0.0
        %427 = vmatprep.subr.mxu0 0.0
        %428 = vmatpush1.msra.mxu0 0.0
        %429 = vmatprep.subr.mxu0 0.0
        %430 = vmatpush1.msra.mxu0 0.0
        %431 = vmatprep.subr.mxu0 0.0
        %432 = vmatpush1.msra.mxu0 0.0
        %433 = vmatprep.subr.mxu0 0.0
        %434 = vmatpush1.msra.mxu0 0.0
        %435 = vmatprep.subr.mxu0 0.0
        %436 = vmatpush1.msra.mxu0 0.0
        %437 = vmatprep.subr.mxu0 0.0
        %438 = vmatpush1.msra.mxu0 0.0
        %439 = vmatprep.subr.mxu0 0.0
        %440 = vmatpush1.msra.mxu0 0.0
        %441 = vmatprep.subr.mxu0 0.0
        %442 = vmatpush1.msra.mxu0 0.0
        %443 = vmatprep.subr.mxu0 0.0
        %444 = vmatpush1.msra.mxu0 0.0
        %445 = vmatprep.subr.mxu0 0.0
        %446 = vmatpush1.msra.mxu0 0.0
        %447 = vmatprep.subr.mxu0 0.0
        %448 = vmatpush1.msra.mxu0 0.0
        %449 = vmatprep.subr.mxu0 0.0
        %450 = vmatpush1.msra.mxu0 0.0
        %451 = vmatprep.subr.mxu0 0.0
        %452 = vmatpush1.msra.mxu0 0.0
        %453 = vmatprep.subr.mxu0 0.0
        %v454 = vand.u32 %v205, 4294901760
        %v455 = vsub.f32 %v205, %v454
        %456 = vmatpush1.msra.mxu0 %v455
        %457 = vmatprep.subr.mxu0 0.0
        %v458 = vand.u32 %v204, 4294901760
        %v459 = vsub.f32 %v204, %v458
        %460 = vmatpush1.msra.mxu0 %v459
        %461 = vmatprep.subr.mxu0 0.0
        %462 = vmatpush2.msra.mxu0 0.0
        %463 = vmatprep.subr.mxu0 0.0
        %464 = vmatpush2.msra.mxu0 0.0
        %465 = vmatprep.subr.mxu0 0.0
        %466 = vmatpush2.msra.mxu0 0.0
        %467 = vmatprep.subr.mxu0 0.0
        %468 = vmatpush2.msra.mxu0 0.0
        %469 = vmatprep.subr.mxu0 0.0
        %470 = vmatpush2.msra.mxu0 0.0
        %471 = vmatprep.subr.mxu0 0.0
        %472 = vmatpush2.msra.mxu0 0.0
        %473 = vmatprep.subr.mxu0 0.0
        %474 = vmatpush2.msra.mxu0 0.0
        %475 = vmatprep.subr.mxu0 0.0
        %476 = vmatpush2.msra.mxu0 0.0
        %477 = vmatprep.subr.mxu0 0.0
        %478 = vmatpush2.msra.mxu0 0.0
        %479 = vmatprep.subr.mxu0 0.0
        %480 = vmatpush2.msra.mxu0 0.0
        %481 = vmatprep.subr.mxu0 0.0
        %482 = vmatpush2.msra.mxu0 0.0
        %483 = vmatprep.subr.mxu0 0.0
        %484 = vmatpush2.msra.mxu0 0.0
        %485 = vmatprep.subr.mxu0 0.0
        %486 = vmatpush2.msra.mxu0 0.0
        %487 = vmatprep.subr.mxu0 0.0
        %488 = vmatpush2.msra.mxu0 0.0
        %489 = vmatprep.subr.mxu0 0.0
        %490 = vmatpush2.msra.mxu0 0.0
        %491 = vmatprep.subr.mxu0 0.0
        %492 = vmatpush2.msra.mxu0 0.0
        %493 = vmatprep.mubr.f32.mxu0 0.0
        %v494 = vand.u32 %v208, 4294901760
        %v495 = vsub.f32 %v208, %v494
        %496 = vmatmul.mubr.f32.gmra.mxu0 %v495
        %v497 = vpop.f32.mrf.mxu0
        %v498 = vadd.f32 %v404, %v497
        %v499 = vpop.f32.mrf.mxu0
        %500 = vmatprep.mubr.f32.mxu0 0.0
        %v501 = vand.u32 %v211, 4294901760
        %v502 = vsub.f32 %v211, %v501
        %503 = vmatmul.mubr.f32.gmra.mxu0 %v502
        %v504 = vpop.f32.mrf.mxu0
        %v505 = vadd.f32 %v410, %v504
        %v506 = vpop.f32.mrf.mxu0
        %507 = vmatprep.mubr.f32.mxu0 0.0
        %v508 = vand.u32 %v214, 4294901760
        %v509 = vsub.f32 %v214, %v508
        %510 = vmatmul.mubr.f32.gmra.mxu0 %v509
        %v511 = vpop.f32.mrf.mxu0
        %v512 = vadd.f32 %v416, %v511
        %v513 = vpop.f32.mrf.mxu0
        %514 = vmatprep.mubr.f32.mxu0 0.0
        %v515 = vand.u32 %v217, 4294901760
        %v516 = vsub.f32 %v217, %v515
        %517 = vmatmul.mubr.f32.gmra.mxu0 %v516
        %v518 = vpop.f32.mrf.mxu0
        %v519 = vadd.f32 %v422, %v518
        %v520 = vpop.f32.mrf.mxu0
        %521 = vdwg.mxu0
        %522 = vmatprep.subr.mxu0 0.0
        %523 = vmatpush1.msra.mxu0 0.0
        %524 = vmatprep.subr.mxu0 0.0
        %525 = vmatpush1.msra.mxu0 0.0
        %526 = vmatprep.subr.mxu0 0.0
        %527 = vmatpush1.msra.mxu0 0.0
        %528 = vmatprep.subr.mxu0 0.0
        %529 = vmatpush1.msra.mxu0 0.0
        %530 = vmatprep.subr.mxu0 0.0
        %531 = vmatpush1.msra.mxu0 0.0
        %532 = vmatprep.subr.mxu0 0.0
        %533 = vmatpush1.msra.mxu0 0.0
        %534 = vmatprep.subr.mxu0 0.0
        %535 = vmatpush1.msra.mxu0 0.0
        %536 = vmatprep.subr.mxu0 0.0
        %537 = vmatpush1.msra.mxu0 0.0
        %538 = vmatprep.subr.mxu0 0.0
        %539 = vmatpush1.msra.mxu0 0.0
        %540 = vmatprep.subr.mxu0 0.0
        %541 = vmatpush1.msra.mxu0 0.0
        %542 = vmatprep.subr.mxu0 0.0
        %543 = vmatpush1.msra.mxu0 0.0
        %544 = vmatprep.subr.mxu0 0.0
        %545 = vmatpush1.msra.mxu0 0.0
        %546 = vmatprep.subr.mxu0 0.0
        %547 = vmatpush1.msra.mxu0 0.0
        %548 = vmatprep.subr.mxu0 0.0
        %549 = vmatpush1.msra.mxu0 0.0
        %550 = vmatprep.subr.mxu0 0.0
        %v551 = vand.u32 %v205, 4294901760
        %552 = vmatpush1.msra.mxu0 %v551
        %553 = vmatprep.subr.mxu0 0.0
        %v554 = vand.u32 %v204, 4294901760
        %555 = vmatpush1.msra.mxu0 %v554
        %556 = vmatprep.subr.mxu0 0.0
        %557 = vmatpush2.msra.mxu0 0.0
        %558 = vmatprep.subr.mxu0 0.0
        %559 = vmatpush2.msra.mxu0 0.0
        %560 = vmatprep.subr.mxu0 0.0
        %561 = vmatpush2.msra.mxu0 0.0
        %562 = vmatprep.subr.mxu0 0.0
        %563 = vmatpush2.msra.mxu0 0.0
        %564 = vmatprep.subr.mxu0 0.0
        %565 = vmatpush2.msra.mxu0 0.0
        %566 = vmatprep.subr.mxu0 0.0
        %567 = vmatpush2.msra.mxu0 0.0
        %568 = vmatprep.subr.mxu0 0.0
        %569 = vmatpush2.msra.mxu0 0.0
        %570 = vmatprep.subr.mxu0 0.0
        %571 = vmatpush2.msra.mxu0 0.0
        %572 = vmatprep.subr.mxu0 0.0
        %573 = vmatpush2.msra.mxu0 0.0
        %574 = vmatprep.subr.mxu0 0.0
        %575 = vmatpush2.msra.mxu0 0.0
        %576 = vmatprep.subr.mxu0 0.0
        %577 = vmatpush2.msra.mxu0 0.0
        %578 = vmatprep.subr.mxu0 0.0
        %579 = vmatpush2.msra.mxu0 0.0
        %580 = vmatprep.subr.mxu0 0.0
        %581 = vmatpush2.msra.mxu0 0.0
        %582 = vmatprep.subr.mxu0 0.0
        %583 = vmatpush2.msra.mxu0 0.0
        %584 = vmatprep.subr.mxu0 0.0
        %585 = vmatpush2.msra.mxu0 0.0
        %586 = vmatprep.subr.mxu0 0.0
        %587 = vmatpush2.msra.mxu0 0.0
        %588 = vmatprep.mubr.f32.mxu0 0.0
        %v589 = vand.u32 %v208, 4294901760
        %v590 = vsub.f32 %v208, %v589
        %v591 = vand.u32 %v590, 4294901760
        %592 = vmatmul.mubr.f32.gmra.mxu0 %v591
        %v593 = vpop.f32.mrf.mxu0
        %v594 = vadd.f32 %v498, %v593
        %v595 = vpop.f32.mrf.mxu0
        %596 = vmatprep.mubr.f32.mxu0 0.0
        %v597 = vand.u32 %v211, 4294901760
        %v598 = vsub.f32 %v211, %v597
        %v599 = vand.u32 %v598, 4294901760
        %600 = vmatmul.mubr.f32.gmra.mxu0 %v599
        %v601 = vpop.f32.mrf.mxu0
        %v602 = vadd.f32 %v505, %v601
        %v603 = vpop.f32.mrf.mxu0
        %604 = vmatprep.mubr.f32.mxu0 0.0
        %v605 = vand.u32 %v214, 4294901760
        %v606 = vsub.f32 %v214, %v605
        %v607 = vand.u32 %v606, 4294901760
        %608 = vmatmul.mubr.f32.gmra.mxu0 %v607
        %v609 = vpop.f32.mrf.mxu0
        %v610 = vadd.f32 %v512, %v609
        %v611 = vpop.f32.mrf.mxu0
        %612 = vmatprep.mubr.f32.mxu0 0.0
        %v613 = vand.u32 %v217, 4294901760
        %v614 = vsub.f32 %v217, %v613
        %v615 = vand.u32 %v614, 4294901760
        %616 = vmatmul.mubr.f32.gmra.mxu0 %v615
        %v617 = vpop.f32.mrf.mxu0
        %v618 = vadd.f32 %v519, %v617
        %v619 = vpop.f32.mrf.mxu0
        %620 = vdwg.mxu0
        %621 = vmatprep.subr.mxu0 0.0
        %622 = vmatpush1.msra.mxu0 0.0
        %623 = vmatprep.subr.mxu0 0.0
        %624 = vmatpush1.msra.mxu0 0.0
        %625 = vmatprep.subr.mxu0 0.0
        %626 = vmatpush1.msra.mxu0 0.0
        %627 = vmatprep.subr.mxu0 0.0
        %628 = vmatpush1.msra.mxu0 0.0
        %629 = vmatprep.subr.mxu0 0.0
        %630 = vmatpush1.msra.mxu0 0.0
        %631 = vmatprep.subr.mxu0 0.0
        %632 = vmatpush1.msra.mxu0 0.0
        %633 = vmatprep.subr.mxu0 0.0
        %634 = vmatpush1.msra.mxu0 0.0
        %635 = vmatprep.subr.mxu0 0.0
        %636 = vmatpush1.msra.mxu0 0.0
        %637 = vmatprep.subr.mxu0 0.0
        %638 = vmatpush1.msra.mxu0 0.0
        %639 = vmatprep.subr.mxu0 0.0
        %640 = vmatpush1.msra.mxu0 0.0
        %641 = vmatprep.subr.mxu0 0.0
        %642 = vmatpush1.msra.mxu0 0.0
        %643 = vmatprep.subr.mxu0 0.0
        %644 = vmatpush1.msra.mxu0 0.0
        %645 = vmatprep.subr.mxu0 0.0
        %646 = vmatpush1.msra.mxu0 0.0
        %647 = vmatprep.subr.mxu0 0.0
        %648 = vmatpush1.msra.mxu0 0.0
        %649 = vmatprep.subr.mxu0 0.0
        %v650 = vand.u32 %v205, 4294901760
        %v651 = vsub.f32 %v205, %v650
        %v652 = vand.u32 %v651, 4294901760
        %653 = vmatpush1.msra.mxu0 %v652
        %654 = vmatprep.subr.mxu0 0.0
        %v655 = vand.u32 %v204, 4294901760
        %v656 = vsub.f32 %v204, %v655
        %v657 = vand.u32 %v656, 4294901760
        %658 = vmatpush1.msra.mxu0 %v657
        %659 = vmatprep.subr.mxu0 0.0
        %660 = vmatpush2.msra.mxu0 0.0
        %661 = vmatprep.subr.mxu0 0.0
        %662 = vmatpush2.msra.mxu0 0.0
        %663 = vmatprep.subr.mxu0 0.0
        %664 = vmatpush2.msra.mxu0 0.0
        %665 = vmatprep.subr.mxu0 0.0
        %666 = vmatpush2.msra.mxu0 0.0
        %667 = vmatprep.subr.mxu0 0.0
        %668 = vmatpush2.msra.mxu0 0.0
        %669 = vmatprep.subr.mxu0 0.0
        %670 = vmatpush2.msra.mxu0 0.0
        %671 = vmatprep.subr.mxu0 0.0
        %672 = vmatpush2.msra.mxu0 0.0
        %673 = vmatprep.subr.mxu0 0.0
        %674 = vmatpush2.msra.mxu0 0.0
        %675 = vmatprep.subr.mxu0 0.0
        %676 = vmatpush2.msra.mxu0 0.0
        %677 = vmatprep.subr.mxu0 0.0
        %678 = vmatpush2.msra.mxu0 0.0
        %679 = vmatprep.subr.mxu0 0.0
        %680 = vmatpush2.msra.mxu0 0.0
        %681 = vmatprep.subr.mxu0 0.0
        %682 = vmatpush2.msra.mxu0 0.0
        %683 = vmatprep.subr.mxu0 0.0
        %684 = vmatpush2.msra.mxu0 0.0
        %685 = vmatprep.subr.mxu0 0.0
        %686 = vmatpush2.msra.mxu0 0.0
        %687 = vmatprep.subr.mxu0 0.0
        %688 = vmatpush2.msra.mxu0 0.0
        %689 = vmatprep.subr.mxu0 0.0
        %690 = vmatpush2.msra.mxu0 0.0
        %691 = vmatprep.mubr.f32.mxu0 0.0
        %v692 = vand.u32 %v208, 4294901760
        %693 = vmatmul.mubr.f32.gmra.mxu0 %v692
        %v694 = vpop.f32.mrf.mxu0
        %v695 = vadd.f32 %v594, %v694
        %v696 = vpop.f32.mrf.mxu0
        %697 = vmatprep.mubr.f32.mxu0 0.0
        %v698 = vand.u32 %v211, 4294901760
        %699 = vmatmul.mubr.f32.gmra.mxu0 %v698
        %v700 = vpop.f32.mrf.mxu0
        %v701 = vadd.f32 %v602, %v700
        %v702 = vpop.f32.mrf.mxu0
        %703 = vmatprep.mubr.f32.mxu0 0.0
        %v704 = vand.u32 %v214, 4294901760
        %705 = vmatmul.mubr.f32.gmra.mxu0 %v704
        %v706 = vpop.f32.mrf.mxu0
        %v707 = vadd.f32 %v610, %v706
        %v708 = vpop.f32.mrf.mxu0
        %709 = vmatprep.mubr.f32.mxu0 0.0
        %v710 = vand.u32 %v217, 4294901760
        %711 = vmatmul.mubr.f32.gmra.mxu0 %v710
        %v712 = vpop.f32.mrf.mxu0
        %v713 = vadd.f32 %v618, %v712
        %v714 = vpop.f32.mrf.mxu0
        %715 = vdwg.mxu0
        %716 = vmatprep.subr.mxu0 0.0
        %717 = vmatpush1.msra.mxu0 0.0
        %718 = vmatprep.subr.mxu0 0.0
        %719 = vmatpush1.msra.mxu0 0.0
        %720 = vmatprep.subr.mxu0 0.0
        %721 = vmatpush1.msra.mxu0 0.0
        %722 = vmatprep.subr.mxu0 0.0
        %723 = vmatpush1.msra.mxu0 0.0
        %724 = vmatprep.subr.mxu0 0.0
        %725 = vmatpush1.msra.mxu0 0.0
        %726 = vmatprep.subr.mxu0 0.0
        %727 = vmatpush1.msra.mxu0 0.0
        %728 = vmatprep.subr.mxu0 0.0
        %729 = vmatpush1.msra.mxu0 0.0
        %730 = vmatprep.subr.mxu0 0.0
        %731 = vmatpush1.msra.mxu0 0.0
        %732 = vmatprep.subr.mxu0 0.0
        %733 = vmatpush1.msra.mxu0 0.0
        %734 = vmatprep.subr.mxu0 0.0
        %735 = vmatpush1.msra.mxu0 0.0
        %736 = vmatprep.subr.mxu0 0.0
        %737 = vmatpush1.msra.mxu0 0.0
        %738 = vmatprep.subr.mxu0 0.0
        %739 = vmatpush1.msra.mxu0 0.0
        %740 = vmatprep.subr.mxu0 0.0
        %741 = vmatpush1.msra.mxu0 0.0
        %742 = vmatprep.subr.mxu0 0.0
        %743 = vmatpush1.msra.mxu0 0.0
        %744 = vmatprep.subr.mxu0 0.0
        %v745 = vand.u32 %v205, 4294901760
        %746 = vmatpush1.msra.mxu0 %v745
        %747 = vmatprep.subr.mxu0 0.0
        %v748 = vand.u32 %v204, 4294901760
        %749 = vmatpush1.msra.mxu0 %v748
        %750 = vmatprep.subr.mxu0 0.0
        %751 = vmatpush2.msra.mxu0 0.0
        %752 = vmatprep.subr.mxu0 0.0
        %753 = vmatpush2.msra.mxu0 0.0
        %754 = vmatprep.subr.mxu0 0.0
        %755 = vmatpush2.msra.mxu0 0.0
        %756 = vmatprep.subr.mxu0 0.0
        %757 = vmatpush2.msra.mxu0 0.0
        %758 = vmatprep.subr.mxu0 0.0
        %759 = vmatpush2.msra.mxu0 0.0
        %760 = vmatprep.subr.mxu0 0.0
        %761 = vmatpush2.msra.mxu0 0.0
        %762 = vmatprep.subr.mxu0 0.0
        %763 = vmatpush2.msra.mxu0 0.0
        %764 = vmatprep.subr.mxu0 0.0
        %765 = vmatpush2.msra.mxu0 0.0
        %766 = vmatprep.subr.mxu0 0.0
        %767 = vmatpush2.msra.mxu0 0.0
        %768 = vmatprep.subr.mxu0 0.0
        %769 = vmatpush2.msra.mxu0 0.0
        %770 = vmatprep.subr.mxu0 0.0
        %771 = vmatpush2.msra.mxu0 0.0
        %772 = vmatprep.subr.mxu0 0.0
        %773 = vmatpush2.msra.mxu0 0.0
        %774 = vmatprep.subr.mxu0 0.0
        %775 = vmatpush2.msra.mxu0 0.0
        %776 = vmatprep.subr.mxu0 0.0
        %777 = vmatpush2.msra.mxu0 0.0
        %778 = vmatprep.subr.mxu0 0.0
        %779 = vmatpush2.msra.mxu0 0.0
        %780 = vmatprep.subr.mxu0 0.0
        %781 = vmatpush2.msra.mxu0 0.0
        %782 = vmatprep.mubr.f32.mxu0 0.0
        %v783 = vand.u32 %v208, 4294901760
        %784 = vmatmul.mubr.f32.gmra.mxu0 %v783
        %v785 = vpop.f32.mrf.mxu0
        %v786 = vadd.f32 %v695, %v785
        %v787 = vpop.f32.mrf.mxu0
        %788 = vmatprep.mubr.f32.mxu0 0.0
        %v789 = vand.u32 %v211, 4294901760
        %790 = vmatmul.mubr.f32.gmra.mxu0 %v789
        %v791 = vpop.f32.mrf.mxu0
        %v792 = vadd.f32 %v701, %v791
        %v793 = vpop.f32.mrf.mxu0
        %794 = vmatprep.mubr.f32.mxu0 0.0
        %v795 = vand.u32 %v214, 4294901760
        %796 = vmatmul.mubr.f32.gmra.mxu0 %v795
        %v797 = vpop.f32.mrf.mxu0
        %v798 = vadd.f32 %v707, %v797
        %v799 = vpop.f32.mrf.mxu0
        %800 = vmatprep.mubr.f32.mxu0 0.0
        %v801 = vand.u32 %v217, 4294901760
        %802 = vmatmul.mubr.f32.gmra.mxu0 %v801
        %v803 = vpop.f32.mrf.mxu0
        %v804 = vadd.f32 %v713, %v803
        %v805 = vpop.f32.mrf.mxu0
        %806 = vdwg.mxu0
        %v807 = vlaneseq
        %v808 = vshrl.u32 %v807, 7
        %v809 = vsub.s32 0, %v808
        %v810 = vrot.slane %v786, %v809
        %v811 = vlaneseq
        %v812 = vshrl.u32 %v811, 7
        %v813 = vsub.s32 0, %v812
        %v814 = vrot.slane %v798, %v813
        %815 = vst [vmem:[%s195] sm:$0xff] %v810
        %816 = vst [vmem:[%s195 + $0x80] sm:$0xff] %v814
        %v817 = vlaneseq
        %v818 = vshrl.u32 %v817, 7
        %v819 = vsub.s32 1, %v818
        %v820 = vrot.slane %v786, %v819
        %v821 = vlaneseq
        %v822 = vshrl.u32 %v821, 7
        %v823 = vsub.s32 1, %v822
        %v824 = vrot.slane %v798, %v823
        %825 = vst [vmem:[%s195 + $0x8] sm:$0xff] %v820
        %826 = vst [vmem:[%s195 + $0x88] sm:$0xff] %v824
        %v827 = vlaneseq
        %v828 = vshrl.u32 %v827, 7
        %v829 = vsub.s32 2, %v828
        %v830 = vrot.slane %v786, %v829
        %v831 = vlaneseq
        %v832 = vshrl.u32 %v831, 7
        %v833 = vsub.s32 2, %v832
        %v834 = vrot.slane %v798, %v833
        %835 = vst [vmem:[%s195 + $0x10] sm:$0xff] %v830
        %836 = vst [vmem:[%s195 + $0x90] sm:$0xff] %v834
        %v837 = vlaneseq
        %v838 = vshrl.u32 %v837, 7
        %v839 = vsub.s32 3, %v838
        %v840 = vrot.slane %v786, %v839
        %v841 = vlaneseq
        %v842 = vshrl.u32 %v841, 7
        %v843 = vsub.s32 3, %v842
        %v844 = vrot.slane %v798, %v843
        %845 = vst [vmem:[%s195 + $0x18] sm:$0xff] %v840
        %846 = vst [vmem:[%s195 + $0x98] sm:$0xff] %v844
        %v847 = vlaneseq
        %v848 = vshrl.u32 %v847, 7
        %v849 = vsub.s32 4, %v848
        %v850 = vrot.slane %v786, %v849
        %v851 = vlaneseq
        %v852 = vshrl.u32 %v851, 7
        %v853 = vsub.s32 4, %v852
        %v854 = vrot.slane %v798, %v853
        %855 = vst [vmem:[%s195 + $0x20] sm:$0xff] %v850
        %856 = vst [vmem:[%s195 + $0xa0] sm:$0xff] %v854
        %v857 = vlaneseq
        %v858 = vshrl.u32 %v857, 7
        %v859 = vsub.s32 5, %v858
        %v860 = vrot.slane %v786, %v859
        %v861 = vlaneseq
        %v862 = vshrl.u32 %v861, 7
        %v863 = vsub.s32 5, %v862
        %v864 = vrot.slane %v798, %v863
        %865 = vst [vmem:[%s195 + $0x28] sm:$0xff] %v860
        %866 = vst [vmem:[%s195 + $0xa8] sm:$0xff] %v864
        %v867 = vlaneseq
        %v868 = vshrl.u32 %v867, 7
        %v869 = vsub.s32 6, %v868
        %v870 = vrot.slane %v786, %v869
        %v871 = vlaneseq
        %v872 = vshrl.u32 %v871, 7
        %v873 = vsub.s32 6, %v872
        %v874 = vrot.slane %v798, %v873
        %875 = vst [vmem:[%s195 + $0x30] sm:$0xff] %v870
        %876 = vst [vmem:[%s195 + $0xb0] sm:$0xff] %v874
        %v877 = vlaneseq
        %v878 = vshrl.u32 %v877, 7
        %v879 = vsub.s32 7, %v878
        %v880 = vrot.slane %v786, %v879
        %v881 = vlaneseq
        %v882 = vshrl.u32 %v881, 7
        %v883 = vsub.s32 7, %v882
        %v884 = vrot.slane %v798, %v883
        %885 = vst [vmem:[%s195 + $0x38] sm:$0xff] %v880
        %886 = vst [vmem:[%s195 + $0xb8] sm:$0xff] %v884
        %v887 = vlaneseq
        %v888 = vshrl.u32 %v887, 7
        %v889 = vsub.s32 0, %v888
        %v890 = vrot.slane %v792, %v889
        %v891 = vlaneseq
        %v892 = vshrl.u32 %v891, 7
        %v893 = vsub.s32 0, %v892
        %v894 = vrot.slane %v804, %v893
        %895 = vst [vmem:[%s195 + $0x40] sm:$0xff] %v890
        %896 = vst [vmem:[%s195 + $0xc0] sm:$0xff] %v894
        %v897 = vlaneseq
        %v898 = vshrl.u32 %v897, 7
        %v899 = vsub.s32 1, %v898
        %v900 = vrot.slane %v792, %v899
        %v901 = vlaneseq
        %v902 = vshrl.u32 %v901, 7
        %v903 = vsub.s32 1, %v902
        %v904 = vrot.slane %v804, %v903
        %905 = vst [vmem:[%s195 + $0x48] sm:$0xff] %v900
        %906 = vst [vmem:[%s195 + $0xc8] sm:$0xff] %v904
        %v907 = vlaneseq
        %v908 = vshrl.u32 %v907, 7
        %v909 = vsub.s32 2, %v908
        %v910 = vrot.slane %v792, %v909
        %v911 = vlaneseq
        %v912 = vshrl.u32 %v911, 7
        %v913 = vsub.s32 2, %v912
        %v914 = vrot.slane %v804, %v913
        %915 = vst [vmem:[%s195 + $0x50] sm:$0xff] %v910
        %916 = vst [vmem:[%s195 + $0xd0] sm:$0xff] %v914
        %v917 = vlaneseq
        %v918 = vshrl.u32 %v917, 7
        %v919 = vsub.s32 3, %v918
        %v920 = vrot.slane %v792, %v919
        %v921 = vlaneseq
        %v922 = vshrl.u32 %v921, 7
        %v923 = vsub.s32 3, %v922
        %v924 = vrot.slane %v804, %v923
        %925 = vst [vmem:[%s195 + $0x58] sm:$0xff] %v920
        %926 = vst [vmem:[%s195 + $0xd8] sm:$0xff] %v924
        %v927 = vlaneseq
        %v928 = vshrl.u32 %v927, 7
        %v929 = vsub.s32 4, %v928
        %v930 = vrot.slane %v792, %v929
        %v931 = vlaneseq
        %v932 = vshrl.u32 %v931, 7
        %v933 = vsub.s32 4, %v932
        %v934 = vrot.slane %v804, %v933
        %935 = vst [vmem:[%s195 + $0x60] sm:$0xff] %v930
        %936 = vst [vmem:[%s195 + $0xe0] sm:$0xff] %v934
        %v937 = vlaneseq
        %v938 = vshrl.u32 %v937, 7
        %v939 = vsub.s32 5, %v938
        %v940 = vrot.slane %v792, %v939
        %v941 = vlaneseq
        %v942 = vshrl.u32 %v941, 7
        %v943 = vsub.s32 5, %v942
        %v944 = vrot.slane %v804, %v943
        %945 = vst [vmem:[%s195 + $0x68] sm:$0xff] %v940
        %946 = vst [vmem:[%s195 + $0xe8] sm:$0xff] %v944
        %v947 = vlaneseq
        %v948 = vshrl.u32 %v947, 7
        %v949 = vsub.s32 6, %v948
        %v950 = vrot.slane %v792, %v949
        %v951 = vlaneseq
        %v952 = vshrl.u32 %v951, 7
        %v953 = vsub.s32 6, %v952
        %v954 = vrot.slane %v804, %v953
        %955 = vst [vmem:[%s195 + $0x70] sm:$0xff] %v950
        %956 = vst [vmem:[%s195 + $0xf0] sm:$0xff] %v954
        %v957 = vlaneseq
        %v958 = vshrl.u32 %v957, 7
        %v959 = vsub.s32 7, %v958
        %v960 = vrot.slane %v792, %v959
        %v961 = vlaneseq
        %v962 = vshrl.u32 %v961, 7
        %v963 = vsub.s32 7, %v962
        %v964 = vrot.slane %v804, %v963
        %965 = vst [vmem:[%s195 + $0x78] sm:$0xff] %v960
        %966 = vst [vmem:[%s195 + $0xf8] sm:$0xff] %v964
        %s967 = sand.u32 %s91, 1
        %s968 = scalar_lea.sflag [#allocation4], %s967
        %s969 = sand.u32 %s91, 1
        %s970 = smul.addr %s969, 256
        %s971 = scalar_lea.vmem [#allocation7], %s970
        // Predicated region
        $region37: #{tpu_custom_call.1} parent=27 // pred_check
          %p972 = pneg %p101
        $region38: #{tpu_custom_call.1} parent=27 // pred_check_branch
          %974 = sbr.rel (%p972) target = $region40
        $region39: #{tpu_custom_call.1} parent=27 // pred_region
          %s975 = smul.u32 2, %s24
          %s976 = smul.u32 16, %s25
          %s978 = ssub.s32 4096, 4096
          %979 = vsyncadd %s968, %s978
          %s980 = smul.addr %s975, 16
          %s981 = sadd.s32 %s976, %s980
          %s982 = smul.addr %s981, 128
          %s983 = scalar_lea.hbm %s2, %s982
          %s984 = sshll.u32 %s971, 4
          %s985 = int_to_ptr.vmem [resolvable:$true] %s984
          %990 = dma.vmem_to_hbm [thread:$0]  %s985, 4096, %s983, %s968, 128, 128, 8
        $region40: #{tpu_custom_call.1} parent=27 // pred_fallthru
          _
      $region28: #{tpu_custom_call.1} parent=5 // pred_fallthru
        _
      %p991 = scmp.le.s32.totalorder 2, %s15
      // Predicated region
      $region41: #{tpu_custom_call.1} parent=5 // pred_check
        %p992 = pneg %p991
      $region42: #{tpu_custom_call.1} parent=5 // pred_check_branch
        %994 = sbr.rel (%p992) target = $region44
      $region43: #{tpu_custom_call.1} parent=5 // pred_region
        %s995 = ssub.s32 %s15, 2
        // Predicated region
        $region45: #{tpu_custom_call.1} parent=43 // pred_check
          %p996 = pneg %p107
        $region46: #{tpu_custom_call.1} parent=43 // pred_check_branch
          %998 = sbr.rel (%p996) target = $region48
        $region47: #{tpu_custom_call.1} parent=43 // pred_region
          %s999 = sand.u32 %s92, 1
          %s1000 = scalar_lea.sflag [#allocation4], %s999
          %s1001 = sand.u32 %s92, 1
          %s1002 = smul.addr %s1001, 256
          %s1003 = scalar_lea.vmem [#allocation7], %s1002
          %1004 = dma.done %s1000, 4096
        $region48: #{tpu_custom_call.1} parent=43 // pred_fallthru
          _
      $region44: #{tpu_custom_call.1} parent=5 // pred_fallthru
        _
    $region6: #{tpu_custom_call.1} parent=1 // loop_footer
      %s19 = sadd.s32 1, %s15
    $region7: #{tpu_custom_call.1} parent=1 // loop_footer_branch
      %14 = sbr.rel target = $region3
    $region8: #{tpu_custom_call.1} parent=1 // loop_exit
      _
    %1005 = vsyncpa [#allocation3], 1
    %s1006 = scalar_lea.sflag [#allocation3], 1
    %1007 = vsyncpa %s1006, 1
    %1008 = vsyncpa [#allocation6], 1
    %s1009 = scalar_lea.sflag [#allocation6], 1
    %1010 = vsyncpa %s1009, 1
    %1011 = vsyncpa [#allocation4], 1
    %s1012 = scalar_lea.sflag [#allocation4], 1
    %1013 = vsyncpa %s1012, 1

</llo_original>
